<compile_context>
chip_gen: v5e
topology: v5e:2x2
jax: 0.10.0
libtpu: 0.0.40
codegen_flags: <defaults>
</compile_context>

<pallas_src>
import jax
import jax.numpy as jnp
from jax.experimental import pallas as pl
from jax.experimental.pallas import tpu as pltpu


def _round_up(n, m):
    return (n + m - 1) // m * m


def age_mlp_kernel(x_ref, w1_ref, b1_ref, w2_ref, b2_ref, w3_ref, b3_ref, o_ref):
    # fc1 + relu: cast the f32 x tile to the matmul dtype (bf16) on the VPU,
    # bf16 MXU matmul with f32 accumulation; bias/ReLU in f32 on the VPU.
    x = x_ref[...].astype(w1_ref.dtype)
    h1 = jnp.dot(x, w1_ref[...], preferred_element_type=jnp.float32) + b1_ref[...]
    h1 = jnp.maximum(h1, 0.0)
    # fc2 + relu (cast activations back to the matmul dtype to keep the MXU in bf16).
    h2 = jnp.dot(h1.astype(w2_ref.dtype), w2_ref[...],
                 preferred_element_type=jnp.float32) + b2_ref[...]
    h2 = jnp.maximum(h2, 0.0)
    # fc3 (out_features = 1): a 1-wide MXU matmul would use 1 of 128/256 result
    # columns, so do a VPU multiply + lane reduction instead. w3 is (1, hidden).
    o_ref[...] = jnp.sum(h2 * w3_ref[...], axis=-1, keepdims=True) + b3_ref[...]


def age_mlp_forward(x, params, *, block_B=2048, matmul_dtype=jnp.bfloat16):
    """x: [B, in_dim] float32. Returns [B] (squeeze of the [B, 1] fc3 output)."""
    w1, b1, w2, b2, w3, b3 = params
    B, in_dim = x.shape
    hidden = w1.shape[1]

    # Weights are tiny (<=80 KiB) and VMEM-resident; casting them once in the
    # wrapper is negligible and avoids a per-grid-step recast in the kernel.
    # x stays f32 in HBM (no wrapper cast => no extra full pass over x).
    w1_c = w1.astype(matmul_dtype)
    w2_c = w2.astype(matmul_dtype)

    # Batch tile: big enough to amortize per-step pipeline overhead, small
    # enough that double-buffered f32 x tiles stay well under scoped VMEM.
    blk = min(block_B, _round_up(B, 8))
    grid = (pl.cdiv(B, blk),)  # ragged edge block is masked by Pallas

    const = lambda i: (0, 0)  # weights/biases: same block every step -> VMEM-resident
    out = pl.pallas_call(
        age_mlp_kernel,
        out_shape=jax.ShapeDtypeStruct((B, 1), jnp.float32),
        grid=grid,
        in_specs=[
            pl.BlockSpec((blk, in_dim), lambda i: (i, 0)),  # x tile (pipelined, f32)
            pl.BlockSpec((in_dim, hidden), const),          # w1 (bf16)
            pl.BlockSpec((1, hidden), const),               # b1
            pl.BlockSpec((hidden, hidden), const),          # w2 (bf16)
            pl.BlockSpec((1, hidden), const),               # b2
            pl.BlockSpec((1, hidden), const),               # w3 (row layout)
            pl.BlockSpec((1, 1), const),                    # b3
        ],
        out_specs=pl.BlockSpec((blk, 1), lambda i: (i, 0)),
        compiler_params=pltpu.CompilerParams(
            # Rows are independent: shard the batch grid across both
            # TensorCores on v7x; no-op on v5e/v6e.
            dimension_semantics=("parallel",),
        ),
    )(x, w1_c, b1, w2_c, b2, w3, b3)
    # .squeeze() in the PyTorch module: drop the trailing size-1 dim.
    # TODO(synk): for B == 1 PyTorch .squeeze() returns a 0-d scalar; we keep [1].
    return out[:, 0]


def init_params(key, in_dim=256, hidden=64):
    """Deterministic init matching the PyTorch module's parameter shapes.

    PyTorch Linear(in, out) has weight [out, in]; w1/w2 are stored transposed
    as [in, out] so the kernel does x @ W. fc3's weight is [1, hidden], which
    is already the row layout the kernel wants for the VPU reduce."""
    k1, k2, k3, k4, k5, k6 = jax.random.split(key, 6)
    s1 = 1.0 / jnp.sqrt(in_dim)
    s2 = 1.0 / jnp.sqrt(hidden)
    w1 = jax.random.uniform(k1, (in_dim, hidden), jnp.float32, -s1, s1)
    b1 = jax.random.uniform(k2, (1, hidden), jnp.float32, -s1, s1)
    w2 = jax.random.uniform(k3, (hidden, hidden), jnp.float32, -s2, s2)
    b2 = jax.random.uniform(k4, (1, hidden), jnp.float32, -s2, s2)
    w3 = jax.random.uniform(k5, (1, hidden), jnp.float32, -s2, s2)
    b3 = jax.random.uniform(k6, (1, 1), jnp.float32, -s2, s2)
    return (w1, b1, w2, b2, w3, b3)


def reference_forward(x, params, matmul_dtype=jnp.bfloat16):
    """Pure-JAX reference with the same bf16 matmul-operand casts as the kernel."""
    w1, b1, w2, b2, w3, b3 = params
    h1 = jnp.maximum(
        jnp.dot(x.astype(matmul_dtype), w1.astype(matmul_dtype),
                preferred_element_type=jnp.float32) + b1,
        0.0)
    h2 = jnp.maximum(
        jnp.dot(h1.astype(matmul_dtype), w2.astype(matmul_dtype),
                preferred_element_type=jnp.float32) + b2,
        0.0)
    return (jnp.sum(h2 * w3, axis=-1, keepdims=True) + b3)[:, 0]


if __name__ == "__main__":
    key = jax.random.PRNGKey(0)
    kx, kx2, kp = jax.random.split(key, 3)

    B, in_dim, hidden = 8, 256, 64
    x = jax.random.normal(kx, (B, in_dim), jnp.float32)
    params = init_params(kp, in_dim=in_dim, hidden=hidden)

    # Small-batch path (single grid step, blk == round_up(B, 8)).
    y = jax.block_until_ready(age_mlp_forward(x, params))
    y_ref = reference_forward(x, params)
    assert y.shape == (B,)
    assert jnp.allclose(y, y_ref, atol=1e-2, rtol=1e-2)

    # Multi-step grid path with a non-multiple-of-block batch: exercises the
    # cdiv grid + masked edge block; block_B kept small so the test stays cheap.
    B2 = 300
    x2 = jax.random.normal(kx2, (B2, in_dim), jnp.float32)
    y2 = jax.block_until_ready(age_mlp_forward(x2, params, block_B=128))
    y2_ref = reference_forward(x2, params)
    assert y2.shape == (B2,)
    assert jnp.allclose(y2, y2_ref, atol=1e-2, rtol=1e-2)

    # TODO(synk): hidden=64 half-fills the 128-lane vregs; padding hidden to 128
    # would only matter if the kernel ever became compute-bound (it is x-read bound).
    print("KERNEL_OK")
</pallas_src>

<mosaic_0001>
module attributes {stable_mosaic.version = 11 : i64} {
  func.func @age_mlp_kernel(%arg0: i32, %arg1: memref<8x256xf32, #tpu.memory_space<vmem>>, %arg2: memref<256x64xbf16, #tpu.memory_space<vmem>>, %arg3: memref<1x64xf32, #tpu.memory_space<vmem>>, %arg4: memref<64x64xbf16, #tpu.memory_space<vmem>>, %arg5: memref<1x64xf32, #tpu.memory_space<vmem>>, %arg6: memref<1x64xf32, #tpu.memory_space<vmem>>, %arg7: memref<1x1xf32, #tpu.memory_space<vmem>>, %arg8: memref<8x1xf32, #tpu.memory_space<vmem>>) attributes {dimension_semantics = [#tpu.dimension_semantics<parallel>], iteration_bounds = array<i64: 1>, scalar_prefetch = 0 : i64, scratch_operands = 0 : i64, tpu.core_type = #tpu.core_type<tc>, window_params = [{transform_indices = @transform_0, window_bounds = array<i64: 8, 256>}, {pipeline_mode = #tpu.pipeline_mode<synchronous>, transform_indices = @transform_1, window_bounds = array<i64: 256, 64>}, {pipeline_mode = #tpu.pipeline_mode<synchronous>, transform_indices = @transform_2, window_bounds = array<i64: 1, 64>}, {pipeline_mode = #tpu.pipeline_mode<synchronous>, transform_indices = @transform_3, window_bounds = array<i64: 64, 64>}, {pipeline_mode = #tpu.pipeline_mode<synchronous>, transform_indices = @transform_4, window_bounds = array<i64: 1, 64>}, {pipeline_mode = #tpu.pipeline_mode<synchronous>, transform_indices = @transform_5, window_bounds = array<i64: 1, 64>}, {pipeline_mode = #tpu.pipeline_mode<synchronous>, transform_indices = @transform_6, window_bounds = array<i64: 1, 1>}, {transform_indices = @transform_7, window_bounds = array<i64: 8, 1>}]} {
    %c0 = arith.constant 0 : index
    %c0_0 = arith.constant 0 : index
    %0 = vector.load %arg1[%c0, %c0_0] : memref<8x256xf32, #tpu.memory_space<vmem>>, vector<8x256xf32>
    %1 = arith.truncf %0 : vector<8x256xf32> to vector<8x256xbf16>
    %c0_1 = arith.constant 0 : index
    %c0_2 = arith.constant 0 : index
    %2 = vector.load %arg2[%c0_1, %c0_2] : memref<256x64xbf16, #tpu.memory_space<vmem>>, vector<256x64xbf16>
    %cst = arith.constant dense<0.000000e+00> : vector<8x64xf32>
    %3 = tpu.matmul %1, %2, %cst {dimension_numbers = #tpu.dot_dimension_numbers<[1], [0], [0], [1], [0, 0, 1, 1], [], []>} : vector<8x256xbf16>, vector<256x64xbf16>, vector<8x64xf32> -> vector<8x64xf32>
    %c0_3 = arith.constant 0 : index
    %c0_4 = arith.constant 0 : index
    %4 = vector.load %arg3[%c0_3, %c0_4] : memref<1x64xf32, #tpu.memory_space<vmem>>, vector<1x64xf32>
    %5 = vector.broadcast %4 : vector<1x64xf32> to vector<8x64xf32>
    %6 = arith.addf %3, %5 : vector<8x64xf32>
    %cst_5 = arith.constant 0.000000e+00 : f32
    %7 = vector.broadcast %cst_5 : f32 to vector<8x64xf32>
    %8 = arith.maximumf %6, %7 : vector<8x64xf32>
    %9 = arith.truncf %8 : vector<8x64xf32> to vector<8x64xbf16>
    %c0_6 = arith.constant 0 : index
    %c0_7 = arith.constant 0 : index
    %10 = vector.load %arg4[%c0_6, %c0_7] : memref<64x64xbf16, #tpu.memory_space<vmem>>, vector<64x64xbf16>
    %cst_8 = arith.constant dense<0.000000e+00> : vector<8x64xf32>
    %11 = tpu.matmul %9, %10, %cst_8 {dimension_numbers = #tpu.dot_dimension_numbers<[1], [0], [0], [1], [0, 0, 1, 1], [], []>} : vector<8x64xbf16>, vector<64x64xbf16>, vector<8x64xf32> -> vector<8x64xf32>
    %c0_9 = arith.constant 0 : index
    %c0_10 = arith.constant 0 : index
    %12 = vector.load %arg5[%c0_9, %c0_10] : memref<1x64xf32, #tpu.memory_space<vmem>>, vector<1x64xf32>
    %13 = vector.broadcast %12 : vector<1x64xf32> to vector<8x64xf32>
    %14 = arith.addf %11, %13 : vector<8x64xf32>
    %cst_11 = arith.constant 0.000000e+00 : f32
    %15 = vector.broadcast %cst_11 : f32 to vector<8x64xf32>
    %16 = arith.maximumf %14, %15 : vector<8x64xf32>
    %c0_12 = arith.constant 0 : index
    %c0_13 = arith.constant 0 : index
    %17 = vector.load %arg6[%c0_12, %c0_13] : memref<1x64xf32, #tpu.memory_space<vmem>>, vector<1x64xf32>
    %18 = vector.broadcast %17 : vector<1x64xf32> to vector<8x64xf32>
    %19 = arith.mulf %16, %18 : vector<8x64xf32>
    %cst_14 = arith.constant dense<0.000000e+00> : vector<8xf32>
    %20 = vector.multi_reduction <add>, %19, %cst_14 [1] : vector<8x64xf32> to vector<8xf32>
    %21 = vector.shape_cast %20 : vector<8xf32> to vector<8x1xf32>
    %c0_15 = arith.constant 0 : index
    %c0_16 = arith.constant 0 : index
    %22 = vector.load %arg7[%c0_15, %c0_16] : memref<1x1xf32, #tpu.memory_space<vmem>>, vector<1x1xf32>
    %23 = vector.broadcast %22 : vector<1x1xf32> to vector<8x1xf32>
    %24 = arith.addf %21, %23 : vector<8x1xf32>
    %c0_17 = arith.constant 0 : index
    %c0_18 = arith.constant 0 : index
    %25 = vector.load %arg8[%c0_17, %c0_18] : memref<8x1xf32, #tpu.memory_space<vmem>>, vector<8x1xf32>
    tpu.vector_store %arg8[%c0_17, %c0_18], %24 {strides = array<i32>} : memref<8x1xf32, #tpu.memory_space<vmem>>, vector<8x1xf32>,
    return
  }
  func.func @transform_0(%arg0: i32) -> (i32, i32) {
    %c0_i32 = arith.constant 0 : i32
    %c0_i32_0 = arith.constant 0 : i32
    return %arg0, %c0_i32 : i32, i32
  }
  func.func @transform_1(%arg0: i32) -> (i32, i32) {
    %c0_i32 = arith.constant 0 : i32
    %c0_i32_0 = arith.constant 0 : i32
    %c0_i32_1 = arith.constant 0 : i32
    return %c0_i32, %c0_i32_0 : i32, i32
  }
  func.func @transform_2(%arg0: i32) -> (i32, i32) {
    %c0_i32 = arith.constant 0 : i32
    %c0_i32_0 = arith.constant 0 : i32
    %c0_i32_1 = arith.constant 0 : i32
    return %c0_i32, %c0_i32_0 : i32, i32
  }
  func.func @transform_3(%arg0: i32) -> (i32, i32) {
    %c0_i32 = arith.constant 0 : i32
    %c0_i32_0 = arith.constant 0 : i32
    %c0_i32_1 = arith.constant 0 : i32
    return %c0_i32, %c0_i32_0 : i32, i32
  }
  func.func @transform_4(%arg0: i32) -> (i32, i32) {
    %c0_i32 = arith.constant 0 : i32
    %c0_i32_0 = arith.constant 0 : i32
    %c0_i32_1 = arith.constant 0 : i32
    return %c0_i32, %c0_i32_0 : i32, i32
  }
  func.func @transform_5(%arg0: i32) -> (i32, i32) {
    %c0_i32 = arith.constant 0 : i32
    %c0_i32_0 = arith.constant 0 : i32
    %c0_i32_1 = arith.constant 0 : i32
    return %c0_i32, %c0_i32_0 : i32, i32
  }
  func.func @transform_6(%arg0: i32) -> (i32, i32) {
    %c0_i32 = arith.constant 0 : i32
    %c0_i32_0 = arith.constant 0 : i32
    %c0_i32_1 = arith.constant 0 : i32
    return %c0_i32, %c0_i32_0 : i32, i32
  }
  func.func @transform_7(%arg0: i32) -> (i32, i32) {
    %c0_i32 = arith.constant 0 : i32
    %c0_i32_0 = arith.constant 0 : i32
    return %arg0, %c0_i32 : i32, i32
  }
}

</mosaic_0001>

<llo_original>
// kernel: tpu_custom_call.1
$region0: #{tpu_custom_call.1}
  #allocation0 [shape = 'u32[]', space=smem, size = 0x4, offset = 0x4, fixed_abs, tag = 'smem constant byte address 0x4 - core index']
  #allocation1 [shape = 'u32[72,128]{1,0:T(1,128)}', space=vmem, size = 0x9000, scoped, tag = 'internal scratch']
  #allocation2 [shape = 'f32[1,1]{1,0:T(1,128)S(1)}', space=vmem, size = 0x200, scoped, tag = 'scoped memory for tpu_custom_call.1']
  %s0 = inlined_call_operand.vmem [shape: f32[8,256], index: 0, kind: input, shape index: {}]
  %s1 = inlined_call_operand.vmem [shape: bf16[256,64], index: 1, kind: input, shape index: {}]
  %s2 = inlined_call_operand.vmem [shape: f32[1,64], index: 2, kind: input, shape index: {}]
  %s3 = inlined_call_operand.vmem [shape: bf16[64,64], index: 3, kind: input, shape index: {}]
  %s4 = inlined_call_operand.vmem [shape: f32[1,64], index: 4, kind: input, shape index: {}]
  %s5 = inlined_call_operand.vmem [shape: f32[1,64], index: 5, kind: input, shape index: {}]
  %s6 = inlined_call_operand.<no memory space> [shape: f32[1,1], index: 6, kind: input, shape index: {}]
  %s7 = inlined_call_operand.vmem [shape: f32[8,1], index: 7, kind: output, shape index: {}]
  %s8 = sld [smem:[#allocation0]]
  $region38: #{tpu_custom_call.1} parent=0
    _
  %s10 = ssub.s32 1, %s8
  %s11 = scalar_select 0, %s10, %s8
  %v12 = vstv %s6
  %13 = vst [vmem:[#allocation2] sm:$0x1] %v12
  // Predicated region
  $region2: #{tpu_custom_call.1} parent=0 // pred_check
    _
  $region3: #{tpu_custom_call.1} parent=0 // pred_check_branch
    %15 = sbr.rel (0) target = $region5
  $region4: #{tpu_custom_call.1} parent=0 // pred_region
    _
  $region5: #{tpu_custom_call.1} parent=0 // pred_fallthru
    _
  // Predicated region
  $region6: #{tpu_custom_call.1} parent=0 // pred_check
    _
  $region7: #{tpu_custom_call.1} parent=0 // pred_check_branch
    %17 = sbr.rel (0) target = $region9
  $region8: #{tpu_custom_call.1} parent=0 // pred_region
    _
  $region9: #{tpu_custom_call.1} parent=0 // pred_fallthru
    _
  // Predicated region
  $region10: #{tpu_custom_call.1} parent=0 // pred_check
    _
  $region11: #{tpu_custom_call.1} parent=0 // pred_check_branch
    %19 = sbr.rel (0) target = $region13
  $region12: #{tpu_custom_call.1} parent=0 // pred_region
    _
  $region13: #{tpu_custom_call.1} parent=0 // pred_fallthru
    _
  // Predicated region
  $region14: #{tpu_custom_call.1} parent=0 // pred_check
    _
  $region15: #{tpu_custom_call.1} parent=0 // pred_check_branch
    %21 = sbr.rel (0) target = $region17
  $region16: #{tpu_custom_call.1} parent=0 // pred_region
    _
  $region17: #{tpu_custom_call.1} parent=0 // pred_fallthru
    _
  // Predicated region
  $region18: #{tpu_custom_call.1} parent=0 // pred_check
    _
  $region19: #{tpu_custom_call.1} parent=0 // pred_check_branch
    %23 = sbr.rel (0) target = $region21
  $region20: #{tpu_custom_call.1} parent=0 // pred_region
    _
  $region21: #{tpu_custom_call.1} parent=0 // pred_fallthru
    _
  // Predicated region
  $region22: #{tpu_custom_call.1} parent=0 // pred_check
    _
  $region23: #{tpu_custom_call.1} parent=0 // pred_check_branch
    %25 = sbr.rel (0) target = $region25
  $region24: #{tpu_custom_call.1} parent=0 // pred_region
    _
  $region25: #{tpu_custom_call.1} parent=0 // pred_fallthru
    _
  // Predicated region
  $region26: #{tpu_custom_call.1} parent=0 // pred_check
    _
  $region27: #{tpu_custom_call.1} parent=0 // pred_check_branch
    %27 = sbr.rel (0) target = $region29
  $region28: #{tpu_custom_call.1} parent=0 // pred_region
    _
  $region29: #{tpu_custom_call.1} parent=0 // pred_fallthru
    _
  %v29 = vld [vmem:[%s0] sm:$0xff]
  %v30 = vld [vmem:[%s0 + $0x8] sm:$0xff]
  %v31 = vpack.c.bf16 %v29, %v29
  %v32 = vpack.c.bf16 %v30, %v30
  %v33 = vld [vmem:[%s1] sm:$0xf]
  %v34 = vld [vmem:[%s1 + $0x4] sm:$0xf]
  %v35 = vld [vmem:[%s1 + $0x8] sm:$0xf]
  %v36 = vld [vmem:[%s1 + $0xc] sm:$0xf]
  %v37 = vld [vmem:[%s1 + $0x10] sm:$0xf]
  %v38 = vld [vmem:[%s1 + $0x14] sm:$0xf]
  %v39 = vld [vmem:[%s1 + $0x18] sm:$0xf]
  %v40 = vld [vmem:[%s1 + $0x1c] sm:$0xf]
  %v41 = vld [vmem:[%s1 + $0x20] sm:$0xf]
  %v42 = vld [vmem:[%s1 + $0x24] sm:$0xf]
  %v43 = vld [vmem:[%s1 + $0x28] sm:$0xf]
  %v44 = vld [vmem:[%s1 + $0x2c] sm:$0xf]
  %v45 = vld [vmem:[%s1 + $0x30] sm:$0xf]
  %v46 = vld [vmem:[%s1 + $0x34] sm:$0xf]
  %v47 = vld [vmem:[%s1 + $0x38] sm:$0xf]
  %v48 = vld [vmem:[%s1 + $0x3c] sm:$0xf]
  %v49 = vld [vmem:[%s1 + $0x40] sm:$0xf]
  %v50 = vld [vmem:[%s1 + $0x44] sm:$0xf]
  %v51 = vld [vmem:[%s1 + $0x48] sm:$0xf]
  %v52 = vld [vmem:[%s1 + $0x4c] sm:$0xf]
  %v53 = vld [vmem:[%s1 + $0x50] sm:$0xf]
  %v54 = vld [vmem:[%s1 + $0x54] sm:$0xf]
  %v55 = vld [vmem:[%s1 + $0x58] sm:$0xf]
  %v56 = vld [vmem:[%s1 + $0x5c] sm:$0xf]
  %v57 = vld [vmem:[%s1 + $0x60] sm:$0xf]
  %v58 = vld [vmem:[%s1 + $0x64] sm:$0xf]
  %v59 = vld [vmem:[%s1 + $0x68] sm:$0xf]
  %v60 = vld [vmem:[%s1 + $0x6c] sm:$0xf]
  %v61 = vld [vmem:[%s1 + $0x70] sm:$0xf]
  %v62 = vld [vmem:[%s1 + $0x74] sm:$0xf]
  %v63 = vld [vmem:[%s1 + $0x78] sm:$0xf]
  %v64 = vld [vmem:[%s1 + $0x7c] sm:$0xf]
  %v65 = vld [vmem:[%s2] sm:$0x1]
  %v67 = vperm.slane %v65, 0
  %v101 = vunpack.c.l.b16 %v33
  %v102 = vunpack.c.l.b16 %v34
  %v103 = vunpack.c.l.b16 %v35
  %v104 = vunpack.c.l.b16 %v36
  %v105 = vunpack.c.l.b16 %v37
  %v106 = vunpack.c.l.b16 %v38
  %v107 = vunpack.c.l.b16 %v39
  %v108 = vunpack.c.l.b16 %v40
  %v109 = vunpack.c.l.b16 %v41
  %v110 = vunpack.c.l.b16 %v42
  %v111 = vunpack.c.l.b16 %v43
  %v112 = vunpack.c.l.b16 %v44
  %v113 = vunpack.c.l.b16 %v45
  %v114 = vunpack.c.l.b16 %v46
  %v115 = vunpack.c.l.b16 %v47
  %v116 = vunpack.c.l.b16 %v48
  %v117 = vunpack.c.l.b16 %v49
  %v118 = vunpack.c.l.b16 %v50
  %v119 = vunpack.c.l.b16 %v51
  %v120 = vunpack.c.l.b16 %v52
  %v121 = vunpack.c.l.b16 %v53
  %v122 = vunpack.c.l.b16 %v54
  %v123 = vunpack.c.l.b16 %v55
  %v124 = vunpack.c.l.b16 %v56
  %v125 = vunpack.c.l.b16 %v57
  %v126 = vunpack.c.l.b16 %v58
  %v127 = vunpack.c.l.b16 %v59
  %v128 = vunpack.c.l.b16 %v60
  %v129 = vunpack.c.l.b16 %v61
  %v130 = vunpack.c.l.b16 %v62
  %v131 = vunpack.c.l.b16 %v63
  %v132 = vunpack.c.l.b16 %v64
  %v133 = vpack.c.b16 %v102, %v101
  %v134 = vpack.c.b16 %v104, %v103
  %v135 = vpack.c.b16 %v106, %v105
  %v136 = vpack.c.b16 %v108, %v107
  %v137 = vpack.c.b16 %v110, %v109
  %v138 = vpack.c.b16 %v112, %v111
  %v139 = vpack.c.b16 %v114, %v113
  %v140 = vpack.c.b16 %v116, %v115
  %v141 = vpack.c.b16 %v118, %v117
  %v142 = vpack.c.b16 %v120, %v119
  %v143 = vpack.c.b16 %v122, %v121
  %v144 = vpack.c.b16 %v124, %v123
  %v145 = vpack.c.b16 %v126, %v125
  %v146 = vpack.c.b16 %v128, %v127
  %v147 = vpack.c.b16 %v130, %v129
  %v148 = vpack.c.b16 %v132, %v131
  %165 = vmatpush.bf16.msra.mxu0 %v140
  %166 = vmatpush.bf16.msra.mxu0 %v139
  %167 = vmatpush.bf16.msra.mxu0 %v138
  %168 = vmatpush.bf16.msra.mxu0 %v137
  %169 = vmatpush.bf16.msra.mxu0 %v136
  %170 = vmatpush.bf16.msra.mxu0 %v135
  %171 = vmatpush.bf16.msra.mxu0 %v134
  %172 = vmatpush.bf16.msra.mxu0 %v133
  %173 = vmatmul.bf16.gmra.mxu0 %v31
  %v174 = vpop.f32.mrf.mxu0
  %v175 = vadd.f32 %v67, %v174
  %v176 = vpop.f32.mrf.mxu0
  %177 = vdwg.mxu0
  %178 = vmatpush.bf16.msra.mxu0 %v148
  %179 = vmatpush.bf16.msra.mxu0 %v147
  %180 = vmatpush.bf16.msra.mxu0 %v146
  %181 = vmatpush.bf16.msra.mxu0 %v145
  %182 = vmatpush.bf16.msra.mxu0 %v144
  %183 = vmatpush.bf16.msra.mxu0 %v143
  %184 = vmatpush.bf16.msra.mxu0 %v142
  %185 = vmatpush.bf16.msra.mxu0 %v141
  %186 = vmatmul.bf16.gmra.mxu0 %v32
  %v187 = vpop.f32.mrf.mxu0
  %v188 = vadd.f32 %v175, %v187
  %v189 = vpop.f32.mrf.mxu0
  %190 = vdwg.mxu0
  %v191 = vmax.f32 %v188, 0.0
  %v192 = vpack.c.bf16 %v191, %v191
  %v193 = vld [vmem:[%s3] sm:$0xf]
  %v194 = vld [vmem:[%s3 + $0x4] sm:$0xf]
  %v195 = vld [vmem:[%s3 + $0x8] sm:$0xf]
  %v196 = vld [vmem:[%s3 + $0xc] sm:$0xf]
  %v197 = vld [vmem:[%s3 + $0x10] sm:$0xf]
  %v198 = vld [vmem:[%s3 + $0x14] sm:$0xf]
  %v199 = vld [vmem:[%s3 + $0x18] sm:$0xf]
  %v200 = vld [vmem:[%s3 + $0x1c] sm:$0xf]
  %v201 = vld [vmem:[%s4] sm:$0x1]
  %v203 = vperm.slane %v201, 0
  %v213 = vunpack.c.l.b16 %v193
  %v214 = vunpack.c.l.b16 %v194
  %v215 = vunpack.c.l.b16 %v195
  %v216 = vunpack.c.l.b16 %v196
  %v217 = vunpack.c.l.b16 %v197
  %v218 = vunpack.c.l.b16 %v198
  %v219 = vunpack.c.l.b16 %v199
  %v220 = vunpack.c.l.b16 %v200
  %v221 = vpack.c.b16 %v214, %v213
  %v222 = vpack.c.b16 %v216, %v215
  %v223 = vpack.c.b16 %v218, %v217
  %v224 = vpack.c.b16 %v220, %v219
  %vm229 = vcmask 523264
  %v231 = vsel %vm229, %v192, 0
  %233 = vmatpush.bf16.msra.mxu0 0
  %234 = vmatpush.bf16.msra.mxu0 0
  %235 = vmatpush.bf16.msra.mxu0 0
  %236 = vmatpush.bf16.msra.mxu0 0
  %237 = vmatpush.bf16.msra.mxu0 %v224
  %238 = vmatpush.bf16.msra.mxu0 %v223
  %239 = vmatpush.bf16.msra.mxu0 %v222
  %240 = vmatpush.bf16.msra.mxu0 %v221
  %241 = vmatmul.bf16.gmra.mxu0 %v231
  %v242 = vpop.f32.mrf.mxu0
  %v243 = vadd.f32 %v203, %v242
  %v244 = vpop.f32.mrf.mxu0
  %245 = vdwg.mxu0
  %v246 = vmax.f32 %v243, 0.0
  %v247 = vld [vmem:[%s5] sm:$0x1]
  %v249 = vperm.slane %v247, 0
  %v251 = vmul.f32 %v246, %v249
  %v252 = vsel %vm229, %v251, 0.0
  %253 = vadd.xlane.f32.xlu0 %v252
  %v254 = vpop.xlane.xlu0 %253
  %v255 = vld [vmem:[#allocation2] sm:$0x1]
  %v257 = vperm.slane %v255, 0
  %v259 = vadd.f32 %v254, %v257
  %vm260 = vcmask 7168
  %261 = vst.msk [vmem:[%s7] sm:$0xff] %vm260, %v259
  // Predicated region
  $region30: #{tpu_custom_call.1} parent=0 // pred_check
    _
  $region31: #{tpu_custom_call.1} parent=0 // pred_check_branch
    %263 = sbr.rel (0) target = $region33
  $region32: #{tpu_custom_call.1} parent=0 // pred_region
    _
  $region33: #{tpu_custom_call.1} parent=0 // pred_fallthru
    _
  // Predicated region
  $region34: #{tpu_custom_call.1} parent=0 // pred_check
    _
  $region35: #{tpu_custom_call.1} parent=0 // pred_check_branch
    %265 = sbr.rel (0) target = $region37
  $region36: #{tpu_custom_call.1} parent=0 // pred_region
    _
  $region37: #{tpu_custom_call.1} parent=0 // pred_fallthru
    _

</llo_original>
